<compile_context>
chip_gen: v7x
topology: tpu7x:2x2x1
jax: 0.10.0
libtpu: 0.0.40
codegen_flags: <defaults>
</compile_context>

<pallas_src>
import functools

import jax
import jax.numpy as jnp
import numpy as np
from jax import lax
from jax.experimental import pallas as pl
from jax.experimental.pallas import tpu as pltpu


# ----------------------------- Pallas kernel ---------------------------------


def _deconv_kernel(xr_ref, w_ref, b_ref, o_ref, *, s, n_kh, nb, oqhw, lane_starts,
                   neg_slope, mxu_dtype):
    """One grid step = `nb` batch elements, all s*s output phases, one fused MXU dot.

    xr_ref : (1, nb*s, Cw, F)        bf16  column-shifted, row-flattened input copies
                                           (F = Hp*OQW; Cw = n_kw*Cin)
    w_ref  : (s*s*Cout, s*s*D)       bf16  block-diagonal per-phase weight matrices
    b_ref  : (s*s*Cout, 1)           f32   bias, tiled per phase (broadcast over lanes)
    o_ref  : (1, s*s*Cout, nb*oqhw)  f32   rows = (phase, Cout), lanes = (b, oh, ow)
    """
    # ---- in-vreg im2col assembly: no VMEM scratch store/reload ----
    row_blocks = []
    for rh in range(s):                       # static unroll over (phase, row-tap) blocks
        for rw in range(s):
            for i in range(n_kh):
                st = lane_starts[rh][i]
                parts = [xr_ref[0, b * s + rw, :, st:st + oqhw] for b in range(nb)]
                rb = parts[0] if nb == 1 else jnp.concatenate(parts, axis=-1)  # (Cw, nb*oqhw)
                # f32 for the sublane concat: Cw-row blocks are f32-tile aligned
                # (they are only half a bf16 tile); cast cost is negligible VPU work.
                row_blocks.append(rb.astype(jnp.float32))
    bmat = jnp.concatenate(row_blocks, axis=0).astype(mxu_dtype)   # (s*s*D, nb*oqhw)

    # ---- single fused block-diagonal dot: one MXU push/pop per grid step ----
    acc = jnp.dot(w_ref[...], bmat, preferred_element_type=jnp.float32)  # (s*s*Cout, L) f32

    # ---- epilogue once, on the full slab (f32 on the VPU) ----
    y = acc + b_ref[...]
    o_ref[0] = jnp.maximum(y, neg_slope * y)       # LeakyReLU(0.2): mul + max


def deconv_with_activation_pallas(x, weight_sn, bias, *, stride, padding, dilation,
                                  neg_slope=0.2, mxu_dtype=jnp.bfloat16, grid_blocks=None):
    """ConvTranspose2d (weight already spectral-normalized) + LeakyReLU, groups=1.

    x          : (N, Cin, H, W)    float32, NCHW (consumed directly, no layout transpose)
    weight_sn  : (Cin, Cout, K, K) float32 (PyTorch ConvTranspose2d layout)
    bias       : (Cout,)           float32
    grid_blocks: batch is split into this many grid steps; the rest of the batch is folded
                 onto the MXU lane axis.  Use 1 on single-TensorCore v5e/v6e (collapses grid
                 overhead, fattens lanes); use 2 on v7x so both TensorCores get work.
    returns    : (N, Cout, OH, OW) float32, NCHW
    """
    N, Cin, H, W = x.shape
    Cin_w, Cout, K, K2 = weight_sn.shape
    assert Cin == Cin_w and K == K2
    s, p, d = int(stride), int(padding), int(dilation)

    OH = (H - 1) * s - 2 * p + d * (K - 1) + 1
    OW = (W - 1) * s - 2 * p + d * (K - 1) + 1
    assert OH % s == 0 and OW % s == 0, "output extent must divide by stride for this kernel"
    OQH, OQW = OH // s, OW // s

    if grid_blocks is None:
        grid_blocks = 1                      # best for v5e/v6e; pass 2 for v7x's two TCs
    assert N % grid_blocks == 0, "batch must divide evenly into grid_blocks"
    G = int(grid_blocks)
    nb = N // G

    # ---------------- polyphase tap bookkeeping (static Python) ----------------
    def taps(r):        # kernel taps contributing to output phase r
        return [k for k in range(K) if (k * d) % s == (r + p) % s]

    def off(k, r):      # input offset of tap k at phase r (exact integer by construction)
        return (r + p - k * d) // s

    tap_h = [taps(r) for r in range(s)]
    tap_w = [taps(r) for r in range(s)]
    n_kh, n_kw = len(tap_h[0]), len(tap_w[0])
    assert all(len(t) == n_kh and n_kh > 0 for t in tap_h), "unsupported (K, stride, dilation)"
    assert all(len(t) == n_kw and n_kw > 0 for t in tap_w), "unsupported (K, stride, dilation)"
    D = n_kh * n_kw * Cin
    Cw = n_kw * Cin

    offs_h = [[off(k, r) for k in tap_h[r]] for r in range(s)]
    offs_w = [[off(k, r) for k in tap_w[r]] for r in range(s)]
    all_h = [o for row in offs_h for o in row]
    all_w = [o for row in offs_w for o in row]
    pad_t = max(0, -min(all_h))
    pad_b = max(0, max(all_h) + OQH - 1 - (H - 1))
    pad_l = max(0, -min(all_w))
    pad_r = max(0, max(all_w) + OQW - 1 - (W - 1))
    Hp = H + pad_t + pad_b
    F = Hp * OQW
    OQHW = OQH * OQW
    L = nb * OQHW

    # ------------- input prep: column-shifted, row-flattened copies (layout glue) -------------
    # Stays ~input-sized (no s^2 zero-insertion blow-up); channels stacked so the kernel's
    # im2col is pure aligned slicing.  Shipped to the kernel in bf16 (halves DMA bytes).
    xpad = jnp.pad(x, ((0, 0), (0, 0), (pad_t, pad_b), (pad_l, pad_r)))
    xr_phases = []
    for rw in range(s):
        cols = [xpad[:, :, :, c + pad_l: c + pad_l + OQW] for c in offs_w[rw]]
        xr_phases.append(jnp.concatenate(cols, axis=1).reshape(N, Cw, F))
    xr = jnp.stack(xr_phases, axis=1).reshape(G, nb * s, Cw, F).astype(mxu_dtype)

    # ------- block-diagonal weight: per-phase (Cout, D) blocks, rows ordered (kh, kw, ci) -------
    wmats = []
    for rh in range(s):
        for rw in range(s):
            sub = weight_sn[:, :, tap_h[rh], :][:, :, :, tap_w[rw]]   # (Cin, Cout, n_kh, n_kw)
            wmats.append(jnp.transpose(sub, (2, 3, 0, 1)).reshape(D, Cout).T)   # (Cout, D)
    w_bd = jax.scipy.linalg.block_diag(*wmats).astype(mxu_dtype)      # (s*s*Cout, s*s*D)
    b_bd = jnp.tile(bias.astype(jnp.float32), s * s).reshape(s * s * Cout, 1)

    # lane start (in the flattened F axis) for each (row-phase, row-tap)
    lane_starts = tuple(tuple((o + pad_t) * OQW for o in offs_h[rh]) for rh in range(s))

    kernel = functools.partial(
        _deconv_kernel, s=s, n_kh=n_kh, nb=nb, oqhw=OQHW,
        lane_starts=lane_starts, neg_slope=neg_slope, mxu_dtype=mxu_dtype)

    # Explicit VMEM budget (double-buffered blocks + weights), kept far below v7x's 64 MiB.
    blk_bytes = (nb * s * Cw * F * 2) + (s * s * Cout * s * s * D * 2) \
        + (s * s * Cout * 4) + (s * s * Cout * L * 4)
    vmem_limit = int(min(max(16 * 1024 * 1024, 4 * blk_bytes), 32 * 1024 * 1024))

    out = pl.pallas_call(
        kernel,
        out_shape=jax.ShapeDtypeStruct((G, s * s * Cout, L), jnp.float32),
        grid_spec=pltpu.PrefetchScalarGridSpec(
            num_scalar_prefetch=0,
            grid=(G,),
            in_specs=[
                pl.BlockSpec((1, nb * s, Cw, F), lambda g: (g, 0, 0, 0)),
                pl.BlockSpec((s * s * Cout, s * s * D), lambda g: (0, 0)),
                pl.BlockSpec((s * s * Cout, 1), lambda g: (0, 0)),
            ],
            out_specs=pl.BlockSpec((1, s * s * Cout, L), lambda g: (g, 0, 0)),
        ),
        compiler_params=pltpu.CompilerParams(
            dimension_semantics=("parallel",),   # v7x: grid_blocks=2 keeps both TCs busy
            vmem_limit_bytes=vmem_limit,
        ),
    )(xr, w_bd, b_bd)

    # Phase / batch re-interleave back to NCHW:
    # (G, rh, rw, Cout, b, OQH, OQW) -> (N, Cout, OH, OW)
    out = out.reshape(G, s, s, Cout, nb, OQH, OQW)
    out = jnp.transpose(out, (0, 4, 3, 5, 1, 6, 2)).reshape(N, Cout, OH, OW)
    return out


# --------------------- spectral norm (glue, plain JAX) ------------------------


def spectral_normalize_convT_weight(weight, u, n_power_iterations=1, eps=1e-12):
    """Mimics torch.nn.utils.spectral_norm on ConvTranspose2d (dim=1) during a
    training-mode forward: power-iterate once, divide weight by sigma."""
    Cin, Cout, K, _ = weight.shape
    w_mat = jnp.transpose(weight, (1, 0, 2, 3)).reshape(Cout, -1)

    def _normalize(v):
        # F.normalize semantics: v / max(||v||, eps)
        return v / jnp.maximum(jnp.linalg.norm(v), eps)

    v = None
    for _ in range(n_power_iterations):
        v = _normalize(w_mat.T @ u)
        u = _normalize(w_mat @ v)
    sigma = u @ (w_mat @ v)
    return weight / sigma


# --------------------------------- main ---------------------------------------


if __name__ == "__main__":
    key = jax.random.PRNGKey(0)
    k_x, k_w, k_b, k_u = jax.random.split(key, 4)

    # module config (small, consistent with the PyTorch module)
    N, Cin, H, W = 2, 4, 16, 16
    Cout, K, stride, padding, dilation = 8, 4, 2, 1, 1

    x = jax.random.normal(k_x, (N, Cin, H, W), jnp.float32)

    # kaiming-normal-ish deterministic init for ConvTranspose2d weight (Cin, Cout, K, K)
    fan_in = Cout * K * K
    std = float(np.sqrt(2.0 / fan_in))
    weight = jax.random.normal(k_w, (Cin, Cout, K, K), jnp.float32) * std
    bound = 1.0 / float(np.sqrt(Cin * K * K))
    bias = jax.random.uniform(k_b, (Cout,), jnp.float32, -bound, bound)

    # spectral norm state vector u (as PyTorch initializes it: normalized gaussian)
    u0 = jax.random.normal(k_u, (Cout,), jnp.float32)
    u0 = u0 / (jnp.linalg.norm(u0) + 1e-12)

    w_sn = spectral_normalize_convT_weight(weight, u0)

    # ---------------- reference (plain JAX, same bf16-rounded MXU operands) ----------------
    xq = x.astype(jnp.bfloat16).astype(jnp.float32)
    wq = w_sn.astype(jnp.bfloat16).astype(jnp.float32)
    w_conv = jnp.transpose(wq[:, :, ::-1, ::-1], (1, 0, 2, 3))        # OIHW, spatially flipped
    P = dilation * (K - 1) - padding
    assert P >= 0
    ref = lax.conv_general_dilated(
        xq, w_conv, window_strides=(1, 1),
        padding=[(P, P), (P, P)],
        lhs_dilation=(stride, stride), rhs_dilation=(dilation, dilation),
        dimension_numbers=("NCHW", "OIHW", "NCHW"),
        precision=lax.Precision.HIGHEST,
    ) + bias.reshape(1, Cout, 1, 1)
    ref = jnp.where(ref > 0, ref, 0.2 * ref)

    OH = (H - 1) * stride - 2 * padding + dilation * (K - 1) + 1
    OW = (W - 1) * stride - 2 * padding + dilation * (K - 1) + 1

    # grid_blocks=1: collapsed grid, batch folded onto lanes (v5e/v6e optimum).
    # grid_blocks=2: 2-way parallel grid (v7x optimum, both TensorCores busy).
    for gb in (1, 2):
        out = deconv_with_activation_pallas(
            x, w_sn, bias, stride=stride, padding=padding, dilation=dilation,
            grid_blocks=gb)
        out = jax.block_until_ready(out)
        assert out.shape == (N, Cout, OH, OW)
        np.testing.assert_allclose(np.asarray(out), np.asarray(ref), rtol=1e-4, atol=1e-4)

    print("KERNEL_OK")
</pallas_src>

<mosaic_0001>
module attributes {stable_mosaic.version = 11 : i64} {
  func.func @_deconv_kernel(%arg0: i32, %arg1: memref<1x4x8x288xbf16, #tpu.memory_space<vmem>>, %arg2: memref<32x64xbf16, #tpu.memory_space<vmem>>, %arg3: memref<32x1xf32, #tpu.memory_space<vmem>>, %arg4: memref<1x32x512xf32, #tpu.memory_space<vmem>>) attributes {dimension_semantics = [#tpu.dimension_semantics<parallel>], iteration_bounds = array<i64: 1>, scalar_prefetch = 0 : i64, scratch_operands = 0 : i64, tpu.core_type = #tpu.core_type<tc>, window_params = [{transform_indices = @transform_0, window_bounds = array<i64: 1, 4, 8, 288>}, {pipeline_mode = #tpu.pipeline_mode<synchronous>, transform_indices = @transform_1, window_bounds = array<i64: 32, 64>}, {pipeline_mode = #tpu.pipeline_mode<synchronous>, transform_indices = @transform_2, window_bounds = array<i64: 32, 1>}, {transform_indices = @transform_3, window_bounds = array<i64: 1, 32, 512>}]} {
    %c0 = arith.constant 0 : index
    %c0_0 = arith.constant 0 : index
    %c0_1 = arith.constant 0 : index
    %c16 = arith.constant 16 : index
    %0 = vector.load %arg1[%c0, %c0_0, %c0_1, %c16] : memref<1x4x8x288xbf16, #tpu.memory_space<vmem>>, vector<1x1x8x256xbf16>
    %1 = vector.shape_cast %0 : vector<1x1x8x256xbf16> to vector<8x256xbf16>
    %c0_2 = arith.constant 0 : index
    %c2 = arith.constant 2 : index
    %c0_3 = arith.constant 0 : index
    %c16_4 = arith.constant 16 : index
    %2 = vector.load %arg1[%c0_2, %c2, %c0_3, %c16_4] : memref<1x4x8x288xbf16, #tpu.memory_space<vmem>>, vector<1x1x8x256xbf16>
    %3 = vector.shape_cast %2 : vector<1x1x8x256xbf16> to vector<8x256xbf16>
    %4 = tpu.concatenate %1, %3 in 1 : vector<8x256xbf16>, vector<8x256xbf16> -> vector<8x512xbf16>
    %5 = arith.extf %4 : vector<8x512xbf16> to vector<8x512xf32>
    %c0_5 = arith.constant 0 : index
    %c0_6 = arith.constant 0 : index
    %c0_7 = arith.constant 0 : index
    %c0_8 = arith.constant 0 : index
    %6 = vector.load %arg1[%c0_5, %c0_6, %c0_7, %c0_8] : memref<1x4x8x288xbf16, #tpu.memory_space<vmem>>, vector<1x1x8x256xbf16>
    %7 = vector.shape_cast %6 : vector<1x1x8x256xbf16> to vector<8x256xbf16>
    %c0_9 = arith.constant 0 : index
    %c2_10 = arith.constant 2 : index
    %c0_11 = arith.constant 0 : index
    %c0_12 = arith.constant 0 : index
    %8 = vector.load %arg1[%c0_9, %c2_10, %c0_11, %c0_12] : memref<1x4x8x288xbf16, #tpu.memory_space<vmem>>, vector<1x1x8x256xbf16>
    %9 = vector.shape_cast %8 : vector<1x1x8x256xbf16> to vector<8x256xbf16>
    %10 = tpu.concatenate %7, %9 in 1 : vector<8x256xbf16>, vector<8x256xbf16> -> vector<8x512xbf16>
    %11 = arith.extf %10 : vector<8x512xbf16> to vector<8x512xf32>
    %c0_13 = arith.constant 0 : index
    %c1 = arith.constant 1 : index
    %c0_14 = arith.constant 0 : index
    %c16_15 = arith.constant 16 : index
    %12 = vector.load %arg1[%c0_13, %c1, %c0_14, %c16_15] : memref<1x4x8x288xbf16, #tpu.memory_space<vmem>>, vector<1x1x8x256xbf16>
    %13 = vector.shape_cast %12 : vector<1x1x8x256xbf16> to vector<8x256xbf16>
    %c0_16 = arith.constant 0 : index
    %c3 = arith.constant 3 : index
    %c0_17 = arith.constant 0 : index
    %c16_18 = arith.constant 16 : index
    %14 = vector.load %arg1[%c0_16, %c3, %c0_17, %c16_18] : memref<1x4x8x288xbf16, #tpu.memory_space<vmem>>, vector<1x1x8x256xbf16>
    %15 = vector.shape_cast %14 : vector<1x1x8x256xbf16> to vector<8x256xbf16>
    %16 = tpu.concatenate %13, %15 in 1 : vector<8x256xbf16>, vector<8x256xbf16> -> vector<8x512xbf16>
    %17 = arith.extf %16 : vector<8x512xbf16> to vector<8x512xf32>
    %c0_19 = arith.constant 0 : index
    %c1_20 = arith.constant 1 : index
    %c0_21 = arith.constant 0 : index
    %c0_22 = arith.constant 0 : index
    %18 = vector.load %arg1[%c0_19, %c1_20, %c0_21, %c0_22] : memref<1x4x8x288xbf16, #tpu.memory_space<vmem>>, vector<1x1x8x256xbf16>
    %19 = vector.shape_cast %18 : vector<1x1x8x256xbf16> to vector<8x256xbf16>
    %c0_23 = arith.constant 0 : index
    %c3_24 = arith.constant 3 : index
    %c0_25 = arith.constant 0 : index
    %c0_26 = arith.constant 0 : index
    %20 = vector.load %arg1[%c0_23, %c3_24, %c0_25, %c0_26] : memref<1x4x8x288xbf16, #tpu.memory_space<vmem>>, vector<1x1x8x256xbf16>
    %21 = vector.shape_cast %20 : vector<1x1x8x256xbf16> to vector<8x256xbf16>
    %22 = tpu.concatenate %19, %21 in 1 : vector<8x256xbf16>, vector<8x256xbf16> -> vector<8x512xbf16>
    %23 = arith.extf %22 : vector<8x512xbf16> to vector<8x512xf32>
    %c0_27 = arith.constant 0 : index
    %c0_28 = arith.constant 0 : index
    %c0_29 = arith.constant 0 : index
    %c32 = arith.constant 32 : index
    %24 = vector.load %arg1[%c0_27, %c0_28, %c0_29, %c32] : memref<1x4x8x288xbf16, #tpu.memory_space<vmem>>, vector<1x1x8x256xbf16>
    %25 = vector.shape_cast %24 : vector<1x1x8x256xbf16> to vector<8x256xbf16>
    %c0_30 = arith.constant 0 : index
    %c2_31 = arith.constant 2 : index
    %c0_32 = arith.constant 0 : index
    %c32_33 = arith.constant 32 : index
    %26 = vector.load %arg1[%c0_30, %c2_31, %c0_32, %c32_33] : memref<1x4x8x288xbf16, #tpu.memory_space<vmem>>, vector<1x1x8x256xbf16>
    %27 = vector.shape_cast %26 : vector<1x1x8x256xbf16> to vector<8x256xbf16>
    %28 = tpu.concatenate %25, %27 in 1 : vector<8x256xbf16>, vector<8x256xbf16> -> vector<8x512xbf16>
    %29 = arith.extf %28 : vector<8x512xbf16> to vector<8x512xf32>
    %c0_34 = arith.constant 0 : index
    %c0_35 = arith.constant 0 : index
    %c0_36 = arith.constant 0 : index
    %c16_37 = arith.constant 16 : index
    %30 = vector.load %arg1[%c0_34, %c0_35, %c0_36, %c16_37] : memref<1x4x8x288xbf16, #tpu.memory_space<vmem>>, vector<1x1x8x256xbf16>
    %31 = vector.shape_cast %30 : vector<1x1x8x256xbf16> to vector<8x256xbf16>
    %c0_38 = arith.constant 0 : index
    %c2_39 = arith.constant 2 : index
    %c0_40 = arith.constant 0 : index
    %c16_41 = arith.constant 16 : index
    %32 = vector.load %arg1[%c0_38, %c2_39, %c0_40, %c16_41] : memref<1x4x8x288xbf16, #tpu.memory_space<vmem>>, vector<1x1x8x256xbf16>
    %33 = vector.shape_cast %32 : vector<1x1x8x256xbf16> to vector<8x256xbf16>
    %34 = tpu.concatenate %31, %33 in 1 : vector<8x256xbf16>, vector<8x256xbf16> -> vector<8x512xbf16>
    %35 = arith.extf %34 : vector<8x512xbf16> to vector<8x512xf32>
    %c0_42 = arith.constant 0 : index
    %c1_43 = arith.constant 1 : index
    %c0_44 = arith.constant 0 : index
    %c32_45 = arith.constant 32 : index
    %36 = vector.load %arg1[%c0_42, %c1_43, %c0_44, %c32_45] : memref<1x4x8x288xbf16, #tpu.memory_space<vmem>>, vector<1x1x8x256xbf16>
    %37 = vector.shape_cast %36 : vector<1x1x8x256xbf16> to vector<8x256xbf16>
    %c0_46 = arith.constant 0 : index
    %c3_47 = arith.constant 3 : index
    %c0_48 = arith.constant 0 : index
    %c32_49 = arith.constant 32 : index
    %38 = vector.load %arg1[%c0_46, %c3_47, %c0_48, %c32_49] : memref<1x4x8x288xbf16, #tpu.memory_space<vmem>>, vector<1x1x8x256xbf16>
    %39 = vector.shape_cast %38 : vector<1x1x8x256xbf16> to vector<8x256xbf16>
    %40 = tpu.concatenate %37, %39 in 1 : vector<8x256xbf16>, vector<8x256xbf16> -> vector<8x512xbf16>
    %41 = arith.extf %40 : vector<8x512xbf16> to vector<8x512xf32>
    %c0_50 = arith.constant 0 : index
    %c1_51 = arith.constant 1 : index
    %c0_52 = arith.constant 0 : index
    %c16_53 = arith.constant 16 : index
    %42 = vector.load %arg1[%c0_50, %c1_51, %c0_52, %c16_53] : memref<1x4x8x288xbf16, #tpu.memory_space<vmem>>, vector<1x1x8x256xbf16>
    %43 = vector.shape_cast %42 : vector<1x1x8x256xbf16> to vector<8x256xbf16>
    %c0_54 = arith.constant 0 : index
    %c3_55 = arith.constant 3 : index
    %c0_56 = arith.constant 0 : index
    %c16_57 = arith.constant 16 : index
    %44 = vector.load %arg1[%c0_54, %c3_55, %c0_56, %c16_57] : memref<1x4x8x288xbf16, #tpu.memory_space<vmem>>, vector<1x1x8x256xbf16>
    %45 = vector.shape_cast %44 : vector<1x1x8x256xbf16> to vector<8x256xbf16>
    %46 = tpu.concatenate %43, %45 in 1 : vector<8x256xbf16>, vector<8x256xbf16> -> vector<8x512xbf16>
    %47 = arith.extf %46 : vector<8x512xbf16> to vector<8x512xf32>
    %48 = tpu.concatenate %5, %11, %17, %23, %29, %35, %41, %47 in 0 : vector<8x512xf32>, vector<8x512xf32>, vector<8x512xf32>, vector<8x512xf32>, vector<8x512xf32>, vector<8x512xf32>, vector<8x512xf32>, vector<8x512xf32> -> vector<64x512xf32>
    %49 = arith.truncf %48 : vector<64x512xf32> to vector<64x512xbf16>
    %c0_58 = arith.constant 0 : index
    %c0_59 = arith.constant 0 : index
    %50 = vector.load %arg2[%c0_58, %c0_59] : memref<32x64xbf16, #tpu.memory_space<vmem>>, vector<32x64xbf16>
    %cst = arith.constant dense<0.000000e+00> : vector<32x512xf32>
    %51 = tpu.matmul %50, %49, %cst {dimension_numbers = #tpu.dot_dimension_numbers<[1], [0], [0], [1], [0, 0, 1, 1], [], []>} : vector<32x64xbf16>, vector<64x512xbf16>, vector<32x512xf32> -> vector<32x512xf32>
    %c0_60 = arith.constant 0 : index
    %c0_61 = arith.constant 0 : index
    %52 = vector.load %arg3[%c0_60, %c0_61] : memref<32x1xf32, #tpu.memory_space<vmem>>, vector<32x1xf32>
    %53 = vector.broadcast %52 : vector<32x1xf32> to vector<32x512xf32>
    %54 = arith.addf %51, %53 : vector<32x512xf32>
    %cst_62 = arith.constant 2.000000e-01 : f32
    %55 = vector.broadcast %cst_62 : f32 to vector<32x512xf32>
    %56 = arith.mulf %55, %54 : vector<32x512xf32>
    %57 = arith.maximumf %54, %56 : vector<32x512xf32>
    %c0_63 = arith.constant 0 : index
    %c0_64 = arith.constant 0 : index
    %c0_65 = arith.constant 0 : index
    %58 = vector.load %arg4[%c0_63, %c0_64, %c0_65] : memref<1x32x512xf32, #tpu.memory_space<vmem>>, vector<1x32x512xf32>
    %59 = vector.shape_cast %58 : vector<1x32x512xf32> to vector<32x512xf32>
    %60 = vector.shape_cast %57 : vector<32x512xf32> to vector<1x32x512xf32>
    tpu.vector_store %arg4[%c0_63, %c0_64, %c0_65], %60 {strides = array<i32>} : memref<1x32x512xf32, #tpu.memory_space<vmem>>, vector<1x32x512xf32>,
    return
  }
  func.func @transform_0(%arg0: i32) -> (i32, i32, i32, i32) {
    %c0_i32 = arith.constant 0 : i32
    %c0_i32_0 = arith.constant 0 : i32
    %c0_i32_1 = arith.constant 0 : i32
    %c0_i32_2 = arith.constant 0 : i32
    return %arg0, %c0_i32, %c0_i32_0, %c0_i32_1 : i32, i32, i32, i32
  }
  func.func @transform_1(%arg0: i32) -> (i32, i32) {
    %c0_i32 = arith.constant 0 : i32
    %c0_i32_0 = arith.constant 0 : i32
    %c0_i32_1 = arith.constant 0 : i32
    return %c0_i32, %c0_i32_0 : i32, i32
  }
  func.func @transform_2(%arg0: i32) -> (i32, i32) {
    %c0_i32 = arith.constant 0 : i32
    %c0_i32_0 = arith.constant 0 : i32
    %c0_i32_1 = arith.constant 0 : i32
    return %c0_i32, %c0_i32_0 : i32, i32
  }
  func.func @transform_3(%arg0: i32) -> (i32, i32, i32) {
    %c0_i32 = arith.constant 0 : i32
    %c0_i32_0 = arith.constant 0 : i32
    %c0_i32_1 = arith.constant 0 : i32
    return %arg0, %c0_i32, %c0_i32_0 : i32, i32, i32
  }
}

</mosaic_0001>

<llo_original>
// kernel: tpu_custom_call.1
$region0: #{tpu_custom_call.1}
  #allocation0 [shape = 'u32[]', space=smem, size = 0x4, offset = 0x4, fixed_abs, tag = 'smem constant byte address 0x4 - core index']
  #allocation1 [shape = 'u32[144,128]{1,0:T(1,128)}', space=vmem, size = 0x12000, scoped, tag = 'internal scratch']
  %s0 = inlined_call_operand.hbm [shape: bf16[1,4,8,288], index: 0, kind: input, shape index: {}]
  %s1 = inlined_call_operand.vmem [shape: bf16[32,64], index: 1, kind: input, shape index: {}]
  %s2 = inlined_call_operand.vmem [shape: f32[32,1], index: 2, kind: input, shape index: {}]
  %s3 = inlined_call_operand.hbm [shape: f32[1,32,512], index: 3, kind: output, shape index: {}]
  %s4 = sld [smem:[#allocation0]]
  $region26: #{tpu_custom_call.1} parent=0
    _
  %s6 = ssub.s32 1, %s4
  %s7 = scalar_select 0, %s6, %s4
  $region1: #{tpu_custom_call.1} parent=0
    #allocation2 [shape = 'u8[24576]{0}', space=vmem, size = 0x6000, scoped, tag = 'input window, operand 0, single buffered']
    #allocation3 [shape = 's32[1]{0}', space=sflag, size = 0x4, scoped, tag = 'scoped memory for tpu_custom_call.1']
    #allocation4 [shape = 's32[1]{0}', space=sflag, size = 0x4, scoped, tag = 'scoped memory for tpu_custom_call.1']
    #allocation5 [shape = 'u8[65536]{0}', space=vmem, size = 0x10000, scoped, tag = 'output window, operand 0, single buffered']
    %8 = vsyncpa [#allocation3], 0
    %9 = vsyncpa [#allocation4], 0
    // Predicated region
    $region2: #{tpu_custom_call.1} parent=1 // pred_check
      _
    $region3: #{tpu_custom_call.1} parent=1 // pred_check_branch
      %11 = sbr.rel (0) target = $region5
    $region4: #{tpu_custom_call.1} parent=1 // pred_region
      %s13 = ssub.s32 768, 768
      %14 = vsyncadd [#allocation3], %s13
      %s15 = sshll.u32 [#allocation2], 4
      %s16 = int_to_ptr.vmem [resolvable:$true] %s15
      %21 = dma.hbm_to_vmem [thread:$0]  %s0, 768, %s16, [#allocation3], 192, 192, 12
    $region5: #{tpu_custom_call.1} parent=1 // pred_fallthru
      _
    // Predicated region
    $region6: #{tpu_custom_call.1} parent=1 // pred_check
      _
    $region7: #{tpu_custom_call.1} parent=1 // pred_check_branch
      %23 = sbr.rel (0) target = $region9
    $region8: #{tpu_custom_call.1} parent=1 // pred_region
      _
    $region9: #{tpu_custom_call.1} parent=1 // pred_fallthru
      _
    // Predicated region
    $region10: #{tpu_custom_call.1} parent=1 // pred_check
      _
    $region11: #{tpu_custom_call.1} parent=1 // pred_check_branch
      %25 = sbr.rel (0) target = $region13
    $region12: #{tpu_custom_call.1} parent=1 // pred_region
      _
    $region13: #{tpu_custom_call.1} parent=1 // pred_fallthru
      _
    // Predicated region
    $region14: #{tpu_custom_call.1} parent=1 // pred_check
      _
    $region15: #{tpu_custom_call.1} parent=1 // pred_check_branch
      %27 = sbr.rel (0) target = $region17
    $region16: #{tpu_custom_call.1} parent=1 // pred_region
      %28 = dma.done [#allocation3], 768
    $region17: #{tpu_custom_call.1} parent=1 // pred_fallthru
      _
    %v30 = vld [vmem:[#allocation2] sm:$0xff]
    %v31 = vld [vmem:[#allocation2 + $0x8] sm:$0xf]
    %s32 = scalar_lea.vmem [#allocation2], 24
    %v33 = vld [vmem:[%s32] sm:$0xff]
    %v34 = vld [vmem:[%s32 + $0x8] sm:$0xf]
    %v37 = vunpack.c.l.b16 %v30
    %v38 = vunpack.c.h.b16 %v30
    %v39 = vunpack.c.l.b16 %v31
    %v40 = vpack.c.b16 %v37, %v37
    %v41 = vpack.c.b16 %v38, %v38
    %v42 = vpack.c.b16 %v39, %v39
    %43 = vrot.lane.b32.xlu0 %v40, 112
    %v44 = vpop.permute.xlu0 %43
    %45 = vrot.lane.b32.xlu0 %v41, 112
    %v46 = vpop.permute.xlu0 %45
    %47 = vrot.lane.b32.xlu0 %v42, 112
    %v48 = vpop.permute.xlu0 %47
    %vm49 = vcmask 916480
    %v50 = vsel %vm49, %v44, %v46
    %v51 = vsel %vm49, %v46, %v48
    %v56 = vunpack.c.l.b16 %v33
    %v57 = vunpack.c.h.b16 %v33
    %v58 = vunpack.c.l.b16 %v34
    %v59 = vpack.c.b16 %v56, %v56
    %v60 = vpack.c.b16 %v57, %v57
    %v61 = vpack.c.b16 %v58, %v58
    %62 = vrot.lane.b32.xlu0 %v59, 112
    %v63 = vpop.permute.xlu0 %62
    %64 = vrot.lane.b32.xlu0 %v60, 112
    %v65 = vpop.permute.xlu0 %64
    %66 = vrot.lane.b32.xlu0 %v61, 112
    %v67 = vpop.permute.xlu0 %66
    %v68 = vsel %vm49, %v63, %v65
    %v69 = vsel %vm49, %v65, %v67
    %v72 = vunpack.c.l.bf16 %v50
    %v73 = vunpack.c.l.bf16 %v51
    %v74 = vunpack.c.l.bf16 %v68
    %v75 = vunpack.c.l.bf16 %v69
    %v80 = vunpack.c.l.bf16 %v40
    %v81 = vunpack.c.l.bf16 %v41
    %v82 = vunpack.c.l.bf16 %v59
    %v83 = vunpack.c.l.bf16 %v60
    %s84 = scalar_lea.vmem [#allocation2], 12
    %v85 = vld [vmem:[%s84] sm:$0xff]
    %v86 = vld [vmem:[%s84 + $0x8] sm:$0xf]
    %s87 = scalar_lea.vmem [#allocation2], 36
    %v88 = vld [vmem:[%s87] sm:$0xff]
    %v89 = vld [vmem:[%s87 + $0x8] sm:$0xf]
    %v92 = vunpack.c.l.b16 %v85
    %v93 = vunpack.c.h.b16 %v85
    %v94 = vunpack.c.l.b16 %v86
    %v95 = vpack.c.b16 %v92, %v92
    %v96 = vpack.c.b16 %v93, %v93
    %v97 = vpack.c.b16 %v94, %v94
    %98 = vrot.lane.b32.xlu0 %v95, 112
    %v99 = vpop.permute.xlu0 %98
    %100 = vrot.lane.b32.xlu0 %v96, 112
    %v101 = vpop.permute.xlu0 %100
    %102 = vrot.lane.b32.xlu0 %v97, 112
    %v103 = vpop.permute.xlu0 %102
    %v104 = vsel %vm49, %v99, %v101
    %v105 = vsel %vm49, %v101, %v103
    %v110 = vunpack.c.l.b16 %v88
    %v111 = vunpack.c.h.b16 %v88
    %v112 = vunpack.c.l.b16 %v89
    %v113 = vpack.c.b16 %v110, %v110
    %v114 = vpack.c.b16 %v111, %v111
    %v115 = vpack.c.b16 %v112, %v112
    %116 = vrot.lane.b32.xlu0 %v113, 112
    %v117 = vpop.permute.xlu0 %116
    %118 = vrot.lane.b32.xlu0 %v114, 112
    %v119 = vpop.permute.xlu0 %118
    %120 = vrot.lane.b32.xlu0 %v115, 112
    %v121 = vpop.permute.xlu0 %120
    %v122 = vsel %vm49, %v117, %v119
    %v123 = vsel %vm49, %v119, %v121
    %v126 = vunpack.c.l.bf16 %v104
    %v127 = vunpack.c.l.bf16 %v105
    %v128 = vunpack.c.l.bf16 %v122
    %v129 = vunpack.c.l.bf16 %v123
    %v134 = vunpack.c.l.bf16 %v95
    %v135 = vunpack.c.l.bf16 %v96
    %v136 = vunpack.c.l.bf16 %v113
    %v137 = vunpack.c.l.bf16 %v114
    %138 = vrot.lane.b32.xlu0 %v40, 96
    %v139 = vpop.permute.xlu0 %138
    %140 = vrot.lane.b32.xlu0 %v41, 96
    %v141 = vpop.permute.xlu0 %140
    %142 = vrot.lane.b32.xlu0 %v42, 96
    %v143 = vpop.permute.xlu0 %142
    %vm144 = vcmask 785408
    %v145 = vsel %vm144, %v139, %v141
    %v146 = vsel %vm144, %v141, %v143
    %149 = vrot.lane.b32.xlu0 %v59, 96
    %v150 = vpop.permute.xlu0 %149
    %151 = vrot.lane.b32.xlu0 %v60, 96
    %v152 = vpop.permute.xlu0 %151
    %153 = vrot.lane.b32.xlu0 %v61, 96
    %v154 = vpop.permute.xlu0 %153
    %v155 = vsel %vm144, %v150, %v152
    %v156 = vsel %vm144, %v152, %v154
    %v159 = vunpack.c.l.bf16 %v145
    %v160 = vunpack.c.l.bf16 %v146
    %v161 = vunpack.c.l.bf16 %v155
    %v162 = vunpack.c.l.bf16 %v156
    %163 = vrot.lane.b32.xlu0 %v95, 96
    %v164 = vpop.permute.xlu0 %163
    %165 = vrot.lane.b32.xlu0 %v96, 96
    %v166 = vpop.permute.xlu0 %165
    %167 = vrot.lane.b32.xlu0 %v97, 96
    %v168 = vpop.permute.xlu0 %167
    %v169 = vsel %vm144, %v164, %v166
    %v170 = vsel %vm144, %v166, %v168
    %173 = vrot.lane.b32.xlu0 %v113, 96
    %v174 = vpop.permute.xlu0 %173
    %175 = vrot.lane.b32.xlu0 %v114, 96
    %v176 = vpop.permute.xlu0 %175
    %177 = vrot.lane.b32.xlu0 %v115, 96
    %v178 = vpop.permute.xlu0 %177
    %v179 = vsel %vm144, %v174, %v176
    %v180 = vsel %vm144, %v176, %v178
    %v183 = vunpack.c.l.bf16 %v169
    %v184 = vunpack.c.l.bf16 %v170
    %v185 = vunpack.c.l.bf16 %v179
    %v186 = vunpack.c.l.bf16 %v180
    %v187 = vpack.c.bf16 %v80, %v72
    %v188 = vpack.c.bf16 %v81, %v73
    %v189 = vpack.c.bf16 %v82, %v74
    %v190 = vpack.c.bf16 %v83, %v75
    %v191 = vpack.c.bf16 %v134, %v126
    %v192 = vpack.c.bf16 %v135, %v127
    %v193 = vpack.c.bf16 %v136, %v128
    %v194 = vpack.c.bf16 %v137, %v129
    %v195 = vpack.c.bf16 %v72, %v159
    %v196 = vpack.c.bf16 %v73, %v160
    %v197 = vpack.c.bf16 %v74, %v161
    %v198 = vpack.c.bf16 %v75, %v162
    %v199 = vpack.c.bf16 %v126, %v183
    %v200 = vpack.c.bf16 %v127, %v184
    %v201 = vpack.c.bf16 %v128, %v185
    %v202 = vpack.c.bf16 %v129, %v186
    %v203 = vld [vmem:[%s1] sm:$0xf]
    %v204 = vld [vmem:[%s1 + $0x4] sm:$0xf]
    %v205 = vld [vmem:[%s1 + $0x8] sm:$0xf]
    %v206 = vld [vmem:[%s1 + $0xc] sm:$0xf]
    %v207 = vld [vmem:[%s2] sm:$0xff]
    %v208 = vld [vmem:[%s2 + $0x8] sm:$0xff]
    %v209 = vld [vmem:[%s2 + $0x10] sm:$0xff]
    %v210 = vld [vmem:[%s2 + $0x18] sm:$0xff]
    %212 = vset.pattern.permute.xlu0 0
    %213 = vperm.xlu0 %212, %v207
    %v214 = vpop.permute.xlu0 %213
    %217 = vset.pattern.permute.xlu0 0
    %218 = vperm.xlu0 %217, %v208
    %v219 = vpop.permute.xlu0 %218
    %222 = vset.pattern.permute.xlu0 0
    %223 = vperm.xlu0 %222, %v209
    %v224 = vpop.permute.xlu0 %223
    %227 = vset.pattern.permute.xlu0 0
    %228 = vperm.xlu0 %227, %v210
    %v229 = vpop.permute.xlu0 %228
    %v235 = vunpack.c.l.b16 %v203
    %v236 = vunpack.c.l.b16 %v204
    %v237 = vunpack.c.l.b16 %v205
    %v238 = vunpack.c.l.b16 %v206
    %v239 = vpack.c.b16 %v236, %v235
    %v240 = vpack.c.b16 %v238, %v237
    %vm241 = vcmask 523264
    %v243 = vsel %vm241, %v239, 0
    %v246 = vsel %vm241, %v240, 0
    %248 = vmatprep.subr.bf16.mxu0 %v188
    %249 = vmatpush1.bf16.msra.mxu0 %v187
    %250 = vmatprep.subr.bf16.mxu0 %v192
    %251 = vmatpush1.bf16.msra.mxu0 %v191
    %252 = vmatprep.subr.bf16.mxu0 %v196
    %253 = vmatpush1.bf16.msra.mxu0 %v195
    %254 = vmatprep.subr.bf16.mxu0 %v200
    %255 = vmatpush1.bf16.msra.mxu0 %v199
    %256 = vmatprep.subr.bf16.mxu0 0
    %257 = vmatpush1.bf16.msra.mxu0 0
    %258 = vmatprep.subr.bf16.mxu0 0
    %259 = vmatpush1.bf16.msra.mxu0 0
    %260 = vmatprep.subr.bf16.mxu0 0
    %261 = vmatpush1.bf16.msra.mxu0 0
    %262 = vmatprep.subr.bf16.mxu0 0
    %263 = vmatpush1.bf16.msra.mxu0 0
    %264 = vmatprep.subr.bf16.mxu0 0
    %265 = vmatpush1.bf16.msra.mxu0 0
    %266 = vmatprep.subr.bf16.mxu0 0
    %267 = vmatpush1.bf16.msra.mxu0 0
    %268 = vmatprep.subr.bf16.mxu0 0
    %269 = vmatpush1.bf16.msra.mxu0 0
    %270 = vmatprep.subr.bf16.mxu0 0
    %271 = vmatpush1.bf16.msra.mxu0 0
    %272 = vmatprep.subr.bf16.mxu0 0
    %273 = vmatpush1.bf16.msra.mxu0 0
    %274 = vmatprep.subr.bf16.mxu0 0
    %275 = vmatpush1.bf16.msra.mxu0 0
    %276 = vmatprep.subr.bf16.mxu0 0
    %277 = vmatpush1.bf16.msra.mxu0 0
    %278 = vmatprep.subr.bf16.mxu0 0
    %279 = vmatpush1.bf16.msra.mxu0 0
    %280 = vmatprep.mubr.bf16.mxu0 0
    %281 = vmatmul.mubr.bf16.gmra.mrb[0].mxu0 %v243
    %v282 = vpop.f32.mrb[0].mxu0
    %v283 = vadd.f32 %v214, %v282
    %v284 = vpop.f32.mrb[0].mxu0
    %v285 = vadd.f32 %v214, %v284
    %v286 = vpop.f32.mrb[0].mxu0
    %v287 = vadd.f32 %v219, %v286
    %v288 = vpop.f32.mrb[0].mxu0
    %v289 = vadd.f32 %v219, %v288
    %290 = vmatprep.mubr.bf16.mxu0 0
    %291 = vmatmul.mubr.bf16.gmra.mrb[0].mxu0 %v246
    %v292 = vpop.f32.mrb[0].mxu0
    %v293 = vadd.f32 %v224, %v292
    %v294 = vpop.f32.mrb[0].mxu0
    %v295 = vadd.f32 %v224, %v294
    %v296 = vpop.f32.mrb[0].mxu0
    %v297 = vadd.f32 %v229, %v296
    %v298 = vpop.f32.mrb[0].mxu0
    %v299 = vadd.f32 %v229, %v298
    %300 = vdwg.mxu0
    %301 = vmatprep.subr.bf16.mxu0 %v190
    %302 = vmatpush1.bf16.msra.mxu0 %v189
    %303 = vmatprep.subr.bf16.mxu0 %v194
    %304 = vmatpush1.bf16.msra.mxu0 %v193
    %305 = vmatprep.subr.bf16.mxu0 %v198
    %306 = vmatpush1.bf16.msra.mxu0 %v197
    %307 = vmatprep.subr.bf16.mxu0 %v202
    %308 = vmatpush1.bf16.msra.mxu0 %v201
    %309 = vmatprep.subr.bf16.mxu0 0
    %310 = vmatpush1.bf16.msra.mxu0 0
    %311 = vmatprep.subr.bf16.mxu0 0
    %312 = vmatpush1.bf16.msra.mxu0 0
    %313 = vmatprep.subr.bf16.mxu0 0
    %314 = vmatpush1.bf16.msra.mxu0 0
    %315 = vmatprep.subr.bf16.mxu0 0
    %316 = vmatpush1.bf16.msra.mxu0 0
    %317 = vmatprep.subr.bf16.mxu0 0
    %318 = vmatpush1.bf16.msra.mxu0 0
    %319 = vmatprep.subr.bf16.mxu0 0
    %320 = vmatpush1.bf16.msra.mxu0 0
    %321 = vmatprep.subr.bf16.mxu0 0
    %322 = vmatpush1.bf16.msra.mxu0 0
    %323 = vmatprep.subr.bf16.mxu0 0
    %324 = vmatpush1.bf16.msra.mxu0 0
    %325 = vmatprep.subr.bf16.mxu0 0
    %326 = vmatpush1.bf16.msra.mxu0 0
    %327 = vmatprep.subr.bf16.mxu0 0
    %328 = vmatpush1.bf16.msra.mxu0 0
    %329 = vmatprep.subr.bf16.mxu0 0
    %330 = vmatpush1.bf16.msra.mxu0 0
    %331 = vmatprep.subr.bf16.mxu0 0
    %332 = vmatpush1.bf16.msra.mxu0 0
    %333 = vmatprep.mubr.bf16.mxu0 0
    %334 = vmatmul.mubr.bf16.gmra.mrb[0].mxu0 %v243
    %v335 = vpop.f32.mrb[0].mxu0
    %v336 = vadd.f32 %v214, %v335
    %v337 = vpop.f32.mrb[0].mxu0
    %v338 = vadd.f32 %v214, %v337
    %v339 = vpop.f32.mrb[0].mxu0
    %v340 = vadd.f32 %v219, %v339
    %v341 = vpop.f32.mrb[0].mxu0
    %v342 = vadd.f32 %v219, %v341
    %343 = vmatprep.mubr.bf16.mxu0 0
    %344 = vmatmul.mubr.bf16.gmra.mrb[0].mxu0 %v246
    %v345 = vpop.f32.mrb[0].mxu0
    %v346 = vadd.f32 %v224, %v345
    %v347 = vpop.f32.mrb[0].mxu0
    %v348 = vadd.f32 %v224, %v347
    %v349 = vpop.f32.mrb[0].mxu0
    %v350 = vadd.f32 %v229, %v349
    %v351 = vpop.f32.mrb[0].mxu0
    %v352 = vadd.f32 %v229, %v351
    %353 = vdwg.mxu0
    %v354 = vmul.f32 %v283, 0.2
    %v355 = vmul.f32 %v285, 0.2
    %v356 = vmul.f32 %v336, 0.2
    %v357 = vmul.f32 %v338, 0.2
    %v358 = vmul.f32 %v287, 0.2
    %v359 = vmul.f32 %v289, 0.2
    %v360 = vmul.f32 %v340, 0.2
    %v361 = vmul.f32 %v342, 0.2
    %v362 = vmul.f32 %v293, 0.2
    %v363 = vmul.f32 %v295, 0.2
    %v364 = vmul.f32 %v346, 0.2
    %v365 = vmul.f32 %v348, 0.2
    %v366 = vmul.f32 %v297, 0.2
    %v367 = vmul.f32 %v299, 0.2
    %v368 = vmul.f32 %v350, 0.2
    %v369 = vmul.f32 %v352, 0.2
    %v370 = vmax.f32 %v283, %v354
    %v371 = vmax.f32 %v285, %v355
    %v372 = vmax.f32 %v336, %v356
    %v373 = vmax.f32 %v338, %v357
    %v374 = vmax.f32 %v287, %v358
    %v375 = vmax.f32 %v289, %v359
    %v376 = vmax.f32 %v340, %v360
    %v377 = vmax.f32 %v342, %v361
    %v378 = vmax.f32 %v293, %v362
    %v379 = vmax.f32 %v295, %v363
    %v380 = vmax.f32 %v346, %v364
    %v381 = vmax.f32 %v348, %v365
    %v382 = vmax.f32 %v297, %v366
    %v383 = vmax.f32 %v299, %v367
    %v384 = vmax.f32 %v350, %v368
    %v385 = vmax.f32 %v352, %v369
    %386 = vst [vmem:[#allocation5] sm:$0xff] %v370
    %387 = vst [vmem:[#allocation5 + $0x8] sm:$0xff] %v371
    %388 = vst [vmem:[#allocation5 + $0x10] sm:$0xff] %v372
    %389 = vst [vmem:[#allocation5 + $0x18] sm:$0xff] %v373
    %390 = vst [vmem:[#allocation5 + $0x20] sm:$0xff] %v374
    %391 = vst [vmem:[#allocation5 + $0x28] sm:$0xff] %v375
    %392 = vst [vmem:[#allocation5 + $0x30] sm:$0xff] %v376
    %393 = vst [vmem:[#allocation5 + $0x38] sm:$0xff] %v377
    %394 = vst [vmem:[#allocation5 + $0x40] sm:$0xff] %v378
    %395 = vst [vmem:[#allocation5 + $0x48] sm:$0xff] %v379
    %396 = vst [vmem:[#allocation5 + $0x50] sm:$0xff] %v380
    %397 = vst [vmem:[#allocation5 + $0x58] sm:$0xff] %v381
    %398 = vst [vmem:[#allocation5 + $0x60] sm:$0xff] %v382
    %399 = vst [vmem:[#allocation5 + $0x68] sm:$0xff] %v383
    %400 = vst [vmem:[#allocation5 + $0x70] sm:$0xff] %v384
    %401 = vst [vmem:[#allocation5 + $0x78] sm:$0xff] %v385
    // Predicated region
    $region18: #{tpu_custom_call.1} parent=1 // pred_check
      _
    $region19: #{tpu_custom_call.1} parent=1 // pred_check_branch
      %403 = sbr.rel (0) target = $region21
    $region20: #{tpu_custom_call.1} parent=1 // pred_region
      %s405 = ssub.s32 2048, 2048
      %406 = vsyncadd [#allocation4], %s405
      %s407 = sshll.u32 [#allocation5], 4
      %s408 = int_to_ptr.vmem [resolvable:$true] %s407
      %413 = dma.vmem_to_hbm [thread:$0]  %s408, 2048, %s3, [#allocation4], 512, 512, 32
    $region21: #{tpu_custom_call.1} parent=1 // pred_fallthru
      _
    // Predicated region
    $region22: #{tpu_custom_call.1} parent=1 // pred_check
      _
    $region23: #{tpu_custom_call.1} parent=1 // pred_check_branch
      %415 = sbr.rel (0) target = $region25
    $region24: #{tpu_custom_call.1} parent=1 // pred_region
      %416 = dma.done [#allocation4], 2048
    $region25: #{tpu_custom_call.1} parent=1 // pred_fallthru
      _
    %417 = vsyncpa [#allocation3], 1
    %418 = vsyncpa [#allocation4], 1

</llo_original>
